<compile_context>
chip_gen: v7x
topology: tpu7x:2x2x1
jax: 0.10.0
libtpu: 0.0.40
codegen_flags: <defaults>
</compile_context>

<pallas_src>
import numpy as np
import jax
import jax.numpy as jnp
from jax.experimental import pallas as pl
from jax.experimental.pallas import tpu as pltpu


# ----------------------------------------------------------------------------
# helpers
# ----------------------------------------------------------------------------
def _round_up(x, m):
    return (x + m - 1) // m * m


def _vmem_budget_bytes():
    """Physical VMEM minus ~16 MiB headroom for compiler scratch.

    Never request the full physical VMEM (64 MiB on v7x); fall back to a
    48 MiB budget if the hardware query is unavailable."""
    try:
        cap = int(pltpu.get_tpu_info().vmem_capacity_bytes)
    except Exception:
        cap = 64 << 20
    return max(cap - (16 << 20), 16 << 20)


def pack_ibf_inputs(poly_list, n_vars):
    """List of (T*n_vars, W) IBF polys -> one lane-dense (N*T, n_vars*W) stack.

    Once-per-layer boundary op (LayerModule), NOT part of the node hot path."""
    W = poly_list[0].shape[1]
    return jnp.concatenate([p.reshape(-1, n_vars * W) for p in poly_list],
                           axis=0)


# ----------------------------------------------------------------------------
# Pallas kernel (one grid step = one node x one row tile)
# ----------------------------------------------------------------------------
def _make_layer_kernel(W):
    def kernel(pos_ref, neg_ref, x_over_ref, x_under_ref, out_ref):
        # pos_ref/neg_ref : (R, 1)       per-term weight of this node
        # x_over/x_under  : (R, L)       shared packed input row tile
        # out_ref         : (2, 2, R, L) [under/over][from-over/from-under]
        xo = x_over_ref[...]
        xu = x_under_ref[...]
        L = xo.shape[-1]

        # Multiplying an IBF polynomial by a scalar scales only the first
        # variable's coefficients of every term; in the lane-collapsed layout
        # those are lanes 0..W-1 of every term row.
        lane = jax.lax.broadcasted_iota(jnp.int32, (1, L), 1)
        first_var = lane < W
        one = jnp.float32(1.0)
        mult_pos = jnp.where(first_var, pos_ref[...], one)   # (R, L)
        mult_neg = jnp.where(first_var, neg_ref[...], one)   # (R, L)

        odt = out_ref.dtype
        out_ref[0, 0, :, :] = (xo * mult_neg).astype(odt)   # under <- over  * neg_w
        out_ref[0, 1, :, :] = (xu * mult_pos).astype(odt)   # under <- under * pos_w
        out_ref[1, 0, :, :] = (xo * mult_pos).astype(odt)   # over  <- over  * pos_w
        out_ref[1, 1, :, :] = (xu * mult_neg).astype(odt)   # over  <- under * neg_w

    return kernel


# ----------------------------------------------------------------------------
# layer-batched node combine
# ----------------------------------------------------------------------------
def combine_layer_nodes(layer_pos_weights, layer_neg_weights, layer_biases,
                        x_over_packed, x_under_packed, *, n_vars,
                        row_tile=None):
    """Fused combine for ALL nodes of a layer.

    Returns
      out       : (num_nodes, 2, 2, NT_pad, L)  scaled term rows
                  [:,0,0]=over*neg_w  [:,0,1]=under*pos_w   (-> under poly)
                  [:,1,0]=over*pos_w  [:,1,1]=under*neg_w   (-> over  poly)
                  rows >= N*T are zero padding (value-neutral IBF terms).
      bias_rows : (num_nodes, 8, L)  row 0 = the add_with_constant bias term,
                  rows 1..7 zero padding (keeps everything 8-row aligned).
    """
    NT, L = x_over_packed.shape
    W = L // n_vars
    num_nodes, N = layer_pos_weights.shape
    assert NT % N == 0, "packed stack rows must be N * terms_per_input"
    T = NT // N
    dtype = x_over_packed.dtype
    itemsize = np.dtype(dtype).itemsize

    # ---- row tiling (8-aligned; single-shot when the stack fits VMEM) ------
    budget = _vmem_budget_bytes()
    NT8 = _round_up(NT, 8)
    if row_tile is None:
        # per grid step, double-buffered: 2 input slabs + 4 output slabs
        per_row_bytes = 12 * L * itemsize
        r_limit = max((budget // 2) // per_row_bytes, 8)
        R = max(min(NT8, 1024, (int(r_limit) // 8) * 8), 8)
    else:
        R = max((int(row_tile) // 8) * 8, 8)
        R = min(R, _round_up(NT8, 8))
    NT_pad = _round_up(NT8, R)
    num_row_tiles = NT_pad // R

    if NT_pad != NT:
        pad = ((0, NT_pad - NT), (0, 0))
        x_over_packed = jnp.pad(x_over_packed, pad)
        x_under_packed = jnp.pad(x_under_packed, pad)

    # ---- once-per-layer host-side prep (out of the per-node hot path) ------
    def expand(w):                       # (num_nodes, N) -> (num_nodes, NT_pad, 1)
        rows = jnp.repeat(w.astype(dtype), T, axis=1)
        if NT_pad != NT:
            rows = jnp.pad(rows, ((0, 0), (0, NT_pad - NT)))
        return rows.reshape(num_nodes, NT_pad, 1)

    pos_rows = expand(layer_pos_weights)
    neg_rows = expand(layer_neg_weights)

    # add_with_constant bias term, built once per layer (tiny).
    lane = jnp.arange(L, dtype=jnp.int32)[None, :]
    bias_row0 = jnp.where(
        lane == 0, layer_biases.astype(dtype)[:, None],
        jnp.where(lane % W == 0, jnp.asarray(1.0, dtype),
                  jnp.asarray(0.0, dtype)))                     # (num_nodes, L)
    bias_rows = jnp.zeros((num_nodes, 8, L), dtype).at[:, 0, :].set(bias_row0)

    # ---- cost / compiler params --------------------------------------------
    reads = 2 * NT_pad * L * (num_nodes if num_row_tiles > 1 else 1) \
        + 2 * num_nodes * NT_pad
    writes = num_nodes * 4 * NT_pad * L
    cost = pl.CostEstimate(flops=int(num_nodes * 4 * NT_pad * L),
                           transcendentals=0,
                           bytes_accessed=int(itemsize * (reads + writes)))

    out = pl.pallas_call(
        _make_layer_kernel(W),
        out_shape=jax.ShapeDtypeStruct((num_nodes, 2, 2, NT_pad, L), dtype),
        grid=(num_nodes, num_row_tiles),
        in_specs=[
            pl.BlockSpec((None, R, 1), lambda n, r: (n, r, 0)),   # pos weight col
            pl.BlockSpec((None, R, 1), lambda n, r: (n, r, 0)),   # neg weight col
            pl.BlockSpec((R, L), lambda n, r: (r, 0)),            # x_over (shared)
            pl.BlockSpec((R, L), lambda n, r: (r, 0)),            # x_under (shared)
        ],
        out_specs=pl.BlockSpec((None, 2, 2, R, L),
                               lambda n, r: (n, 0, 0, r, 0)),
        compiler_params=pltpu.CompilerParams(
            dimension_semantics=("parallel", "arbitrary"),
            vmem_limit_bytes=int(budget)),
        cost_estimate=cost,
    )(pos_rows, neg_rows, x_over_packed, x_under_packed)

    return out, bias_rows


# ----------------------------------------------------------------------------
# forward wrappers (linear activation only)
# ----------------------------------------------------------------------------
def layer_forward_linear(n_vars, layer_weights, layer_biases,
                         x_under_packed, x_over_packed,
                         inputs_under_degrees, inputs_over_degrees,
                         row_tile=None):
    """All NodeModule forwards of one LayerModule (activation='linear'),
    batched into a single pallas_call (single distributed rank assumed).

    # TODO(synk): the data-dependent |input|==0 / |weight|==0 skip branches of
    # ibf_tensor_prod_input_weights change output shapes at runtime and are not
    # replicated (zero terms are value-neutral for the polynomial).
    # TODO(synk): LayerModule.linearize (upper/lower_linear_ibf) and the
    # torch.distributed all_gather_object path are not provided -> not ported.
    """
    pos_w = jnp.maximum(layer_weights, 0.0)     # F.relu(W)
    neg_w = jnp.minimum(layer_weights, 0.0)     # -F.relu(-W)
    out, bias_rows = combine_layer_nodes(pos_w, neg_w, layer_biases,
                                         x_over_packed, x_under_packed,
                                         n_vars=n_vars, row_tile=row_tile)
    deg = jnp.maximum(jnp.max(inputs_over_degrees, axis=0),
                      jnp.max(inputs_under_degrees, axis=0))
    node_degs = jnp.broadcast_to(deg[None, :],
                                 (layer_weights.shape[0], n_vars))
    return out, bias_rows, node_degs, node_degs


def node_module_forward(n_vars, node_pos_weights, node_neg_weights, node_bias,
                        activation, x_under_packed, x_over_packed,
                        inputs_under_degrees, inputs_over_degrees):
    """Single NodeModule forward == num_nodes=1 slice of the batched layer
    call.  Prefer layer_forward_linear (amortises the shared input read and the
    launch cost over all nodes of the layer)."""
    if activation != "linear":
        # TODO(synk): 'relu' branch needs ibf_minmax_cpp / relu_monom_coeffs /
        # quad_of_poly (external C++ + data-dependent control flow).
        raise NotImplementedError("only activation='linear' is implemented")
    out, bias_rows = combine_layer_nodes(
        node_pos_weights[None, :], node_neg_weights[None, :],
        jnp.reshape(node_bias, (1,)), x_over_packed, x_under_packed,
        n_vars=n_vars)
    deg = jnp.maximum(jnp.max(inputs_over_degrees, axis=0),
                      jnp.max(inputs_under_degrees, axis=0))
    return out[0], bias_rows[0], deg, deg


# ----------------------------------------------------------------------------
# verification helpers
# ----------------------------------------------------------------------------
def unpack_node_outputs(out, bias_rows, num_valid_terms, n_vars):
    """Kernel outputs -> per-node (under, over) in the conventional torch
    layout ((2*N*T + 1) * n_vars, W), dropping zero pad rows."""
    out = np.asarray(out)
    bias_rows = np.asarray(bias_rows)
    num_nodes = out.shape[0]
    L = out.shape[-1]
    W = L // n_vars

    def conv(rows):                       # (k, L) -> (k*n_vars, W)
        return rows.reshape(-1, n_vars, W).reshape(-1, W)

    unders, overs = [], []
    for n in range(num_nodes):
        b = conv(bias_rows[n, :1])
        unders.append(np.concatenate([conv(out[n, 0, 0, :num_valid_terms]),
                                      conv(out[n, 0, 1, :num_valid_terms]),
                                      b], axis=0))
        overs.append(np.concatenate([conv(out[n, 1, 0, :num_valid_terms]),
                                     conv(out[n, 1, 1, :num_valid_terms]),
                                     b], axis=0))
    return unders, overs


def _ref_node_forward(n_vars, pos_w, neg_w, bias, inputs_under, inputs_over):
    """Pure-numpy NodeModule (linear) reference."""
    def scale_and_cat(xs, w):
        parts = []
        for i, x in enumerate(xs):
            x3 = np.asarray(x).reshape(-1, n_vars, x.shape[1]).copy()
            x3[:, 0, :] *= float(w[i])
            parts.append(x3.reshape(-1, x.shape[1]))
        return np.concatenate(parts, axis=0)

    W = inputs_over[0].shape[1]
    bias_term = np.zeros((n_vars, W), np.float32)
    bias_term[0, 0] = float(bias)
    bias_term[1:, 0] = 1.0
    under = np.concatenate([scale_and_cat(inputs_over, neg_w),
                            scale_and_cat(inputs_under, pos_w), bias_term], 0)
    over = np.concatenate([scale_and_cat(inputs_over, pos_w),
                           scale_and_cat(inputs_under, neg_w), bias_term], 0)
    return under, over


def _run_case(seed, n_vars, T, W, N, num_nodes, row_tile):
    key = jax.random.PRNGKey(seed)
    keys = jax.random.split(key, 6)
    layer_inputs_under = [
        jax.random.normal(keys[0], (T * n_vars, W), jnp.float32) * 0.5 + 0.1 * i
        for i in range(N)]
    layer_inputs_over = [
        jax.random.normal(keys[1], (T * n_vars, W), jnp.float32) * 0.5 + 0.2 * i
        for i in range(N)]
    inputs_under_degrees = jax.random.randint(
        keys[2], (N, n_vars), 0, W).astype(jnp.float32)
    inputs_over_degrees = jax.random.randint(
        keys[3], (N, n_vars), 0, W).astype(jnp.float32)
    layer_weights = jax.random.normal(keys[4], (num_nodes, N), jnp.float32)
    layer_biases = jax.random.normal(keys[5], (num_nodes,), jnp.float32) * 0.5

    # layer-boundary packing (once per layer, shared by all its nodes)
    x_under_packed = pack_ibf_inputs(layer_inputs_under, n_vars)
    x_over_packed = pack_ibf_inputs(layer_inputs_over, n_vars)

    outs = layer_forward_linear(n_vars, layer_weights, layer_biases,
                                x_under_packed, x_over_packed,
                                inputs_under_degrees, inputs_over_degrees,
                                row_tile=row_tile)
    outs = jax.block_until_ready(outs)
    out, bias_rows, deg_u, deg_o = outs

    unders, overs = unpack_node_outputs(out, bias_rows,
                                        num_valid_terms=N * T, n_vars=n_vars)

    pos_w = np.maximum(np.asarray(layer_weights), 0.0)
    neg_w = np.minimum(np.asarray(layer_weights), 0.0)
    np_under = [np.asarray(p) for p in layer_inputs_under]
    np_over = [np.asarray(p) for p in layer_inputs_over]
    ref_deg = np.maximum(np.max(np.asarray(inputs_over_degrees), axis=0),
                         np.max(np.asarray(inputs_under_degrees), axis=0))
    for n in range(num_nodes):
        ref_under, ref_over = _ref_node_forward(
            n_vars, pos_w[n], neg_w[n], float(layer_biases[n]),
            np_under, np_over)
        np.testing.assert_allclose(unders[n], ref_under, rtol=1e-5, atol=1e-5)
        np.testing.assert_allclose(overs[n], ref_over, rtol=1e-5, atol=1e-5)
        np.testing.assert_array_equal(np.asarray(deg_u[n]), ref_deg)
        np.testing.assert_array_equal(np.asarray(deg_o[n]), ref_deg)


if __name__ == "__main__":
    # Case 1: whole stack resident in VMEM (single row tile), 8 nodes batched.
    #   n_vars=8, W=16 -> 128 lanes; N=4 inputs x T=2 terms -> 8 term rows.
    _run_case(seed=0, n_vars=8, T=2, W=16, N=4, num_nodes=8, row_tile=None)

    # Case 2: exercise the 8-aligned row-tiled streaming path (2 row tiles).
    _run_case(seed=0, n_vars=8, T=4, W=16, N=4, num_nodes=4, row_tile=8)

    print("KERNEL_OK")
</pallas_src>

<mosaic_0001>
module attributes {stable_mosaic.version = 11 : i64} {
  func.func @kernel(%arg0: i32, %arg1: i32, %arg2: memref<1x8x1xf32, #tpu.memory_space<vmem>>, %arg3: memref<1x8x1xf32, #tpu.memory_space<vmem>>, %arg4: memref<8x128xf32, #tpu.memory_space<vmem>>, %arg5: memref<8x128xf32, #tpu.memory_space<vmem>>, %arg6: memref<1x2x2x8x128xf32, #tpu.memory_space<vmem>>) attributes {dimension_semantics = [#tpu.dimension_semantics<parallel>, #tpu.dimension_semantics<arbitrary>], iteration_bounds = array<i64: 8, 1>, scalar_prefetch = 0 : i64, scratch_operands = 0 : i64, tpu.core_type = #tpu.core_type<tc>, window_params = [{transform_indices = @transform_0, window_bounds = array<i64: 1, 8, 1>}, {transform_indices = @transform_1, window_bounds = array<i64: 1, 8, 1>}, {transform_indices = @transform_2, window_bounds = array<i64: 8, 128>}, {transform_indices = @transform_3, window_bounds = array<i64: 8, 128>}, {transform_indices = @transform_4, window_bounds = array<i64: 1, 2, 2, 8, 128>}]} {
    %c0 = arith.constant 0 : index
    %c0_0 = arith.constant 0 : index
    %0 = vector.load %arg4[%c0, %c0_0] : memref<8x128xf32, #tpu.memory_space<vmem>>, vector<8x128xf32>
    %c0_1 = arith.constant 0 : index
    %c0_2 = arith.constant 0 : index
    %1 = vector.load %arg5[%c0_1, %c0_2] : memref<8x128xf32, #tpu.memory_space<vmem>>, vector<8x128xf32>
    %2 = tpu.iota {dimensions = array<i32: 1>} : vector<1x128xi32>
    %c16_i32 = arith.constant 16 : i32
    %3 = vector.broadcast %c16_i32 : i32 to vector<1x128xi32>
    %4 = arith.cmpi slt, %2, %3 : vector<1x128xi32>
    %c0_3 = arith.constant 0 : index
    %c0_4 = arith.constant 0 : index
    %c0_5 = arith.constant 0 : index
    %5 = vector.load %arg2[%c0_3, %c0_4, %c0_5] : memref<1x8x1xf32, #tpu.memory_space<vmem>>, vector<1x8x1xf32>
    %6 = vector.shape_cast %5 : vector<1x8x1xf32> to vector<8x1xf32>
    %cst = arith.constant 1.000000e+00 : f32
    %7 = vector.shape_cast %4 : vector<1x128xi1> to vector<1x128xi1>
    %8 = vector.broadcast %7 : vector<1x128xi1> to vector<8x128xi1>
    %9 = vector.shape_cast %6 : vector<8x1xf32> to vector<8x1xf32>
    %10 = vector.broadcast %9 : vector<8x1xf32> to vector<8x128xf32>
    %11 = vector.broadcast %cst : f32 to vector<8x128xf32>
    %12 = arith.select %8, %10, %11 : vector<8x128xi1>, vector<8x128xf32>
    %c0_6 = arith.constant 0 : index
    %c0_7 = arith.constant 0 : index
    %c0_8 = arith.constant 0 : index
    %13 = vector.load %arg3[%c0_6, %c0_7, %c0_8] : memref<1x8x1xf32, #tpu.memory_space<vmem>>, vector<1x8x1xf32>
    %14 = vector.shape_cast %13 : vector<1x8x1xf32> to vector<8x1xf32>
    %cst_9 = arith.constant 1.000000e+00 : f32
    %15 = vector.shape_cast %4 : vector<1x128xi1> to vector<1x128xi1>
    %16 = vector.broadcast %15 : vector<1x128xi1> to vector<8x128xi1>
    %17 = vector.shape_cast %14 : vector<8x1xf32> to vector<8x1xf32>
    %18 = vector.broadcast %17 : vector<8x1xf32> to vector<8x128xf32>
    %19 = vector.broadcast %cst_9 : f32 to vector<8x128xf32>
    %20 = arith.select %16, %18, %19 : vector<8x128xi1>, vector<8x128xf32>
    %21 = arith.mulf %0, %20 : vector<8x128xf32>
    %c0_10 = arith.constant 0 : index
    %c0_11 = arith.constant 0 : index
    %c0_12 = arith.constant 0 : index
    %c0_13 = arith.constant 0 : index
    %c0_14 = arith.constant 0 : index
    %22 = vector.load %arg6[%c0_10, %c0_11, %c0_12, %c0_13, %c0_14] : memref<1x2x2x8x128xf32, #tpu.memory_space<vmem>>, vector<1x1x1x8x128xf32>
    %23 = vector.shape_cast %22 : vector<1x1x1x8x128xf32> to vector<8x128xf32>
    %24 = vector.shape_cast %21 : vector<8x128xf32> to vector<1x1x1x8x128xf32>
    tpu.vector_store %arg6[%c0_10, %c0_11, %c0_12, %c0_13, %c0_14], %24 {strides = array<i32>} : memref<1x2x2x8x128xf32, #tpu.memory_space<vmem>>, vector<1x1x1x8x128xf32>,
    %25 = arith.mulf %1, %12 : vector<8x128xf32>
    %c0_15 = arith.constant 0 : index
    %c0_16 = arith.constant 0 : index
    %c1 = arith.constant 1 : index
    %c0_17 = arith.constant 0 : index
    %c0_18 = arith.constant 0 : index
    %26 = vector.load %arg6[%c0_15, %c0_16, %c1, %c0_17, %c0_18] : memref<1x2x2x8x128xf32, #tpu.memory_space<vmem>>, vector<1x1x1x8x128xf32>
    %27 = vector.shape_cast %26 : vector<1x1x1x8x128xf32> to vector<8x128xf32>
    %28 = vector.shape_cast %25 : vector<8x128xf32> to vector<1x1x1x8x128xf32>
    tpu.vector_store %arg6[%c0_15, %c0_16, %c1, %c0_17, %c0_18], %28 {strides = array<i32>} : memref<1x2x2x8x128xf32, #tpu.memory_space<vmem>>, vector<1x1x1x8x128xf32>,
    %29 = arith.mulf %0, %12 : vector<8x128xf32>
    %c0_19 = arith.constant 0 : index
    %c1_20 = arith.constant 1 : index
    %c0_21 = arith.constant 0 : index
    %c0_22 = arith.constant 0 : index
    %c0_23 = arith.constant 0 : index
    %30 = vector.load %arg6[%c0_19, %c1_20, %c0_21, %c0_22, %c0_23] : memref<1x2x2x8x128xf32, #tpu.memory_space<vmem>>, vector<1x1x1x8x128xf32>
    %31 = vector.shape_cast %30 : vector<1x1x1x8x128xf32> to vector<8x128xf32>
    %32 = vector.shape_cast %29 : vector<8x128xf32> to vector<1x1x1x8x128xf32>
    tpu.vector_store %arg6[%c0_19, %c1_20, %c0_21, %c0_22, %c0_23], %32 {strides = array<i32>} : memref<1x2x2x8x128xf32, #tpu.memory_space<vmem>>, vector<1x1x1x8x128xf32>,
    %33 = arith.mulf %1, %20 : vector<8x128xf32>
    %c0_24 = arith.constant 0 : index
    %c1_25 = arith.constant 1 : index
    %c1_26 = arith.constant 1 : index
    %c0_27 = arith.constant 0 : index
    %c0_28 = arith.constant 0 : index
    %34 = vector.load %arg6[%c0_24, %c1_25, %c1_26, %c0_27, %c0_28] : memref<1x2x2x8x128xf32, #tpu.memory_space<vmem>>, vector<1x1x1x8x128xf32>
    %35 = vector.shape_cast %34 : vector<1x1x1x8x128xf32> to vector<8x128xf32>
    %36 = vector.shape_cast %33 : vector<8x128xf32> to vector<1x1x1x8x128xf32>
    tpu.vector_store %arg6[%c0_24, %c1_25, %c1_26, %c0_27, %c0_28], %36 {strides = array<i32>} : memref<1x2x2x8x128xf32, #tpu.memory_space<vmem>>, vector<1x1x1x8x128xf32>,
    return
  }
  func.func @transform_0(%arg0: i32, %arg1: i32) -> (i32, i32, i32) {
    %c0_i32 = arith.constant 0 : i32
    %c0_i32_0 = arith.constant 0 : i32
    return %arg0, %arg1, %c0_i32 : i32, i32, i32
  }
  func.func @transform_1(%arg0: i32, %arg1: i32) -> (i32, i32, i32) {
    %c0_i32 = arith.constant 0 : i32
    %c0_i32_0 = arith.constant 0 : i32
    return %arg0, %arg1, %c0_i32 : i32, i32, i32
  }
  func.func @transform_2(%arg0: i32, %arg1: i32) -> (i32, i32) {
    %c0_i32 = arith.constant 0 : i32
    %c0_i32_0 = arith.constant 0 : i32
    return %arg1, %c0_i32 : i32, i32
  }
  func.func @transform_3(%arg0: i32, %arg1: i32) -> (i32, i32) {
    %c0_i32 = arith.constant 0 : i32
    %c0_i32_0 = arith.constant 0 : i32
    return %arg1, %c0_i32 : i32, i32
  }
  func.func @transform_4(%arg0: i32, %arg1: i32) -> (i32, i32, i32, i32, i32) {
    %c0_i32 = arith.constant 0 : i32
    %c0_i32_0 = arith.constant 0 : i32
    %c0_i32_1 = arith.constant 0 : i32
    %c0_i32_2 = arith.constant 0 : i32
    return %arg0, %c0_i32, %c0_i32_0, %arg1, %c0_i32_1 : i32, i32, i32, i32, i32
  }
}

</mosaic_0001>

<llo_original>
// kernel: tpu_custom_call.1
$region0: #{tpu_custom_call.1}
  #allocation0 [shape = 'u32[]', space=smem, size = 0x4, offset = 0x4, fixed_abs, tag = 'smem constant byte address 0x4 - core index']
  #allocation1 [shape = 'u32[144,128]{1,0:T(1,128)}', space=vmem, size = 0x12000, scoped, tag = 'internal scratch']
  %s0 = inlined_call_operand.vmem [shape: f32[8,8,1], index: 0, kind: input, shape index: {}]
  %s1 = inlined_call_operand.vmem [shape: f32[8,8,1], index: 1, kind: input, shape index: {}]
  %s2 = inlined_call_operand.vmem [shape: f32[8,128], index: 2, kind: input, shape index: {}]
  %s3 = inlined_call_operand.vmem [shape: f32[8,128], index: 3, kind: input, shape index: {}]
  %s4 = inlined_call_operand.hbm [shape: f32[8,2,2,8,128], index: 4, kind: output, shape index: {}]
  %s5 = sld [smem:[#allocation0]]
  $region49: #{tpu_custom_call.1} parent=0
    _
  %s7 = ssub.s32 1, %s5
  %s8 = scalar_select 0, %s7, %s5
  $region1: #{tpu_custom_call.1} parent=0
    #allocation2 [shape = 'u8[32768]{0}', space=vmem, size = 0x8000, scoped, tag = 'output window, operand 0']
    #allocation3 [shape = 's32[2]{0}', space=sflag, size = 0x8, scoped, tag = 'scoped memory for tpu_custom_call.1']
    %9 = vsyncpa [#allocation3], 0
    %s10 = scalar_lea.sflag [#allocation3], 1
    %11 = vsyncpa %s10, 0
    loop: start=0, step=1, limit=10
    $region2: #{tpu_custom_call.1} parent=1 // loop_pre_header
      _
    $region3: #{tpu_custom_call.1} parent=1 // loop_header
      %s13 = sphi 0, %s17
      %p14 = scmp.ge.s32.totalorder %s13, 10
      %s20 = sphi 0, %s32
      %s21 = sphi 0, %s28
      %s22 = sphi 0, %s20
      %s23 = sphi 0, %s21
      %s24 = sphi 0, %s22
      %s25 = sphi 0, %s23
      %s37 = sphi 0, %s39
      %s40 = sphi 0, %s37
      %s41 = sphi 0, %s40
      %s57 = sphi 0, %s41
      %s65 = sphi 0, %s67
      %s68 = sphi 0, %s65
      %s69 = sphi 0, %s68
      %s85 = sphi 0, %s69
      %s91 = sphi 0, %s93
      %s94 = sphi 0, %s91
      %s95 = sphi 0, %s94
      %s111 = sphi 0, %s95
      %s117 = sphi 0, %s119
      %s120 = sphi 0, %s117
      %s121 = sphi 0, %s120
      %s137 = sphi 0, %s121
      %s145 = sphi 0, %s147
      %s148 = sphi 0, %s145
      %s149 = sphi 0, %s148
      %s165 = sphi 0, %s149
    $region4: #{tpu_custom_call.1} parent=1 // loop_header_branch
      %16 = sbr.rel (%p14) target = $region8
    $region5: #{tpu_custom_call.1} parent=1 // loop_body
      %s18 = ssub.s32 %s13, 1
      %s19 = ssub.s32 %s13, 2
      %s26 = sadd.s32 1, %s21
      %p27 = scmp.ge.s32.totalorder %s26, 1
      %s28 = scalar_select %p27, 0, %s26
      %s29 = sadd.s32 1, %s20
      %s30 = scalar_select %p27, %s29, %s20
      %p31 = scmp.ge.s32.totalorder %s30, 8
      %s32 = scalar_select %p31, 0, %s30
      %s33 = ssub.s32 %s20, %s32
      %s34 = ssub.s32 %s21, %s28
      %s35 = sor.u32 %s33, %s34
      %p36 = scmp.eq.s32.totalorder %s35, 0
      %s38 = sadd.s32 %s37, 1
      %s39 = scalar_select %p36, %s37, %s38
      %p42 = pneg %p36
      %p43 = scmp.eq.s32.totalorder %s13, 7
      %p44 = por %p42, %p43
      %p45 = scmp.ne.s32.totalorder %s37, %s40
      %p46 = scmp.eq.s32.totalorder %s13, 0
      %p47 = por %p45, %p46
      %p48 = scmp.ne.s32.totalorder %s37, %s40
      %p49 = scmp.eq.s32.totalorder %s18, 7
      %p50 = por %p48, %p49
      %p51 = scmp.ne.s32.totalorder %s40, %s41
      %p52 = scmp.eq.s32.totalorder %s18, 0
      %p53 = por %p51, %p52
      %p54 = scmp.ne.s32.totalorder %s40, %s41
      %p55 = scmp.eq.s32.totalorder %s19, 7
      %p56 = por %p54, %p55
      %p58 = scmp.ne.s32.totalorder %s41, %s57
      %p59 = scmp.eq.s32.totalorder %s19, 0
      %p60 = por %p58, %p59
      %s61 = ssub.s32 %s20, %s32
      %s62 = ssub.s32 %s21, %s28
      %s63 = sor.u32 %s61, %s62
      %p64 = scmp.eq.s32.totalorder %s63, 0
      %s66 = sadd.s32 %s65, 1
      %s67 = scalar_select %p64, %s65, %s66
      %p70 = pneg %p64
      %p71 = scmp.eq.s32.totalorder %s13, 7
      %p72 = por %p70, %p71
      %p73 = scmp.ne.s32.totalorder %s65, %s68
      %p74 = scmp.eq.s32.totalorder %s13, 0
      %p75 = por %p73, %p74
      %p76 = scmp.ne.s32.totalorder %s65, %s68
      %p77 = scmp.eq.s32.totalorder %s18, 7
      %p78 = por %p76, %p77
      %p79 = scmp.ne.s32.totalorder %s68, %s69
      %p80 = scmp.eq.s32.totalorder %s18, 0
      %p81 = por %p79, %p80
      %p82 = scmp.ne.s32.totalorder %s68, %s69
      %p83 = scmp.eq.s32.totalorder %s19, 7
      %p84 = por %p82, %p83
      %p86 = scmp.ne.s32.totalorder %s69, %s85
      %p87 = scmp.eq.s32.totalorder %s19, 0
      %p88 = por %p86, %p87
      %s89 = ssub.s32 %s21, %s28
      %p90 = scmp.eq.s32.totalorder %s89, 0
      %s92 = sadd.s32 %s91, 1
      %s93 = scalar_select %p90, %s91, %s92
      %p96 = pneg %p90
      %p97 = scmp.eq.s32.totalorder %s13, 7
      %p98 = por %p96, %p97
      %p99 = scmp.ne.s32.totalorder %s91, %s94
      %p100 = scmp.eq.s32.totalorder %s13, 0
      %p101 = por %p99, %p100
      %p102 = scmp.ne.s32.totalorder %s91, %s94
      %p103 = scmp.eq.s32.totalorder %s18, 7
      %p104 = por %p102, %p103
      %p105 = scmp.ne.s32.totalorder %s94, %s95
      %p106 = scmp.eq.s32.totalorder %s18, 0
      %p107 = por %p105, %p106
      %p108 = scmp.ne.s32.totalorder %s94, %s95
      %p109 = scmp.eq.s32.totalorder %s19, 7
      %p110 = por %p108, %p109
      %p112 = scmp.ne.s32.totalorder %s95, %s111
      %p113 = scmp.eq.s32.totalorder %s19, 0
      %p114 = por %p112, %p113
      %s115 = ssub.s32 %s21, %s28
      %p116 = scmp.eq.s32.totalorder %s115, 0
      %s118 = sadd.s32 %s117, 1
      %s119 = scalar_select %p116, %s117, %s118
      %p122 = pneg %p116
      %p123 = scmp.eq.s32.totalorder %s13, 7
      %p124 = por %p122, %p123
      %p125 = scmp.ne.s32.totalorder %s117, %s120
      %p126 = scmp.eq.s32.totalorder %s13, 0
      %p127 = por %p125, %p126
      %p128 = scmp.ne.s32.totalorder %s117, %s120
      %p129 = scmp.eq.s32.totalorder %s18, 7
      %p130 = por %p128, %p129
      %p131 = scmp.ne.s32.totalorder %s120, %s121
      %p132 = scmp.eq.s32.totalorder %s18, 0
      %p133 = por %p131, %p132
      %p134 = scmp.ne.s32.totalorder %s120, %s121
      %p135 = scmp.eq.s32.totalorder %s19, 7
      %p136 = por %p134, %p135
      %p138 = scmp.ne.s32.totalorder %s121, %s137
      %p139 = scmp.eq.s32.totalorder %s19, 0
      %p140 = por %p138, %p139
      %s141 = ssub.s32 %s20, %s32
      %s142 = ssub.s32 %s21, %s28
      %s143 = sor.u32 %s141, %s142
      %p144 = scmp.eq.s32.totalorder %s143, 0
      %s146 = sadd.s32 %s145, 1
      %s147 = scalar_select %p144, %s145, %s146
      %p150 = pneg %p144
      %p151 = scmp.eq.s32.totalorder %s13, 7
      %p152 = por %p150, %p151
      %p153 = scmp.ne.s32.totalorder %s145, %s148
      %p154 = scmp.eq.s32.totalorder %s13, 0
      %p155 = por %p153, %p154
      %p156 = scmp.ne.s32.totalorder %s145, %s148
      %p157 = scmp.eq.s32.totalorder %s18, 7
      %p158 = por %p156, %p157
      %p159 = scmp.ne.s32.totalorder %s148, %s149
      %p160 = scmp.eq.s32.totalorder %s18, 0
      %p161 = por %p159, %p160
      %p162 = scmp.ne.s32.totalorder %s148, %s149
      %p163 = scmp.eq.s32.totalorder %s19, 7
      %p164 = por %p162, %p163
      %p166 = scmp.ne.s32.totalorder %s149, %s165
      %p167 = scmp.eq.s32.totalorder %s19, 0
      %p168 = por %p166, %p167
      %p169 = scmp.le.s32.totalorder 1, %s13
      %p170 = scmp.lt.s32.totalorder %s13, 9
      %p171 = pnand %p169, %p170
      %p172 = pneg %p171
      // Predicated region
      $region9: #{tpu_custom_call.1} parent=5 // pred_check
        _
      $region10: #{tpu_custom_call.1} parent=5 // pred_check_branch
        %174 = sbr.rel (%p171) target = $region12
      $region11: #{tpu_custom_call.1} parent=5 // pred_region
        %s175 = ssub.s32 %s13, 1
        // Predicated region
        $region13: #{tpu_custom_call.1} parent=11 // pred_check
          %p176 = pneg %p107
        $region14: #{tpu_custom_call.1} parent=11 // pred_check_branch
          %178 = sbr.rel (%p176) target = $region16
        $region15: #{tpu_custom_call.1} parent=11 // pred_region
          %p179 = scmp.lt.s32.totalorder %s23, 0
          %s180 = scalar_select %p179, %s23, 0
          %s181 = smul.addr %s180, 8
          %s182 = scalar_lea.vmem %s2, %s181
        $region16: #{tpu_custom_call.1} parent=11 // pred_fallthru
          _
        // Predicated region
        $region17: #{tpu_custom_call.1} parent=11 // pred_check
          %p183 = pneg %p133
        $region18: #{tpu_custom_call.1} parent=11 // pred_check_branch
          %185 = sbr.rel (%p183) target = $region20
        $region19: #{tpu_custom_call.1} parent=11 // pred_region
          %p186 = scmp.lt.s32.totalorder %s23, 0
          %s187 = scalar_select %p186, %s23, 0
          %s188 = smul.addr %s187, 8
          %s189 = scalar_lea.vmem %s3, %s188
        $region20: #{tpu_custom_call.1} parent=11 // pred_fallthru
          _
      $region12: #{tpu_custom_call.1} parent=5 // pred_fallthru
        _
      %p190 = scmp.lt.s32.totalorder %s13, 8
      // Predicated region
      $region21: #{tpu_custom_call.1} parent=5 // pred_check
        %p191 = pneg %p190
      $region22: #{tpu_custom_call.1} parent=5 // pred_check_branch
        %193 = sbr.rel (%p191) target = $region24
      $region23: #{tpu_custom_call.1} parent=5 // pred_region
        // Predicated region
        $region25: #{tpu_custom_call.1} parent=23 // pred_check
          %p194 = pneg %p47
        $region26: #{tpu_custom_call.1} parent=23 // pred_check_branch
          %196 = sbr.rel (%p194) target = $region28
        $region27: #{tpu_custom_call.1} parent=23 // pred_region
          %p197 = scmp.lt.s32.totalorder %s20, 7
          %s198 = scalar_select %p197, %s20, 7
          %p199 = scmp.lt.s32.totalorder %s21, 0
          %s200 = scalar_select %p199, %s21, 0
          %s201 = sadd.s32 %s200, %s198
          %s202 = smul.addr %s201, 8
          %s203 = scalar_lea.vmem %s0, %s202
        $region28: #{tpu_custom_call.1} parent=23 // pred_fallthru
          _
        // Predicated region
        $region29: #{tpu_custom_call.1} parent=23 // pred_check
          %p204 = pneg %p75
        $region30: #{tpu_custom_call.1} parent=23 // pred_check_branch
          %206 = sbr.rel (%p204) target = $region32
        $region31: #{tpu_custom_call.1} parent=23 // pred_region
          %p207 = scmp.lt.s32.totalorder %s20, 7
          %s208 = scalar_select %p207, %s20, 7
          %p209 = scmp.lt.s32.totalorder %s21, 0
          %s210 = scalar_select %p209, %s21, 0
          %s211 = sadd.s32 %s210, %s208
          %s212 = smul.addr %s211, 8
          %s213 = scalar_lea.vmem %s1, %s212
        $region32: #{tpu_custom_call.1} parent=23 // pred_fallthru
          _
      $region24: #{tpu_custom_call.1} parent=5 // pred_fallthru
        _
      %p214 = scmp.le.s32.totalorder 1, %s13
      %p215 = scmp.lt.s32.totalorder %s13, 9
      %p216 = pnand %p214, %p215
      %p217 = pneg %p216
      // Predicated region
      $region33: #{tpu_custom_call.1} parent=5 // pred_check
        _
      $region34: #{tpu_custom_call.1} parent=5 // pred_check_branch
        %219 = sbr.rel (%p216) target = $region36
      $region35: #{tpu_custom_call.1} parent=5 // pred_region
        %s220 = ssub.s32 %s13, 1
        %p221 = scmp.lt.s32.totalorder %s22, 7
        %s222 = scalar_select %p221, %s22, 7
        %p223 = scmp.lt.s32.totalorder %s23, 0
        %s224 = scalar_select %p223, %s23, 0
        %s225 = sadd.s32 %s224, %s222
        %s226 = smul.addr %s225, 8
        %s227 = scalar_lea.vmem %s0, %s226
        %p228 = pneg %p53
        %p229 = pneg %p50
        %p230 = scmp.lt.s32.totalorder %s22, 7
        %s231 = scalar_select %p230, %s22, 7
        %p232 = scmp.lt.s32.totalorder %s23, 0
        %s233 = scalar_select %p232, %s23, 0
        %s234 = sadd.s32 %s233, %s231
        %s235 = smul.addr %s234, 8
        %s236 = scalar_lea.vmem %s1, %s235
        %p237 = pneg %p81
        %p238 = pneg %p78
        %p239 = scmp.lt.s32.totalorder %s23, 0
        %s240 = scalar_select %p239, %s23, 0
        %s241 = smul.addr %s240, 8
        %s242 = scalar_lea.vmem %s2, %s241
        %p243 = pneg %p107
        %p244 = pneg %p104
        %p245 = scmp.lt.s32.totalorder %s23, 0
        %s246 = scalar_select %p245, %s23, 0
        %s247 = smul.addr %s246, 8
        %s248 = scalar_lea.vmem %s3, %s247
        %p249 = pneg %p133
        %p250 = pneg %p130
        %p251 = pneg %p161
        %p252 = pneg %p158
        %s253 = sand.u32 %s148, 1
        %s254 = scalar_lea.sflag [#allocation3], %s253
        %s255 = sand.u32 %s148, 1
        %s256 = smul.addr %s255, 32
        %s257 = scalar_lea.vmem [#allocation2], %s256
        %p258 = scmp.lt.s32.totalorder %s22, 7
        %s259 = scalar_select %p258, %s22, 7
        %p260 = scmp.lt.s32.totalorder %s23, 0
        %s261 = scalar_select %p260, %s23, 0
        %s262 = sadd.s32 %s261, %s259
        %s263 = smul.addr %s262, 8
        %s264 = scalar_lea.vmem %s0, %s263
        %p265 = scmp.lt.s32.totalorder %s22, 7
        %s266 = scalar_select %p265, %s22, 7
        %p267 = scmp.lt.s32.totalorder %s23, 0
        %s268 = scalar_select %p267, %s23, 0
        %s269 = sadd.s32 %s268, %s266
        %s270 = smul.addr %s269, 8
        %s271 = scalar_lea.vmem %s1, %s270
        %p272 = scmp.lt.s32.totalorder %s23, 0
        %s273 = scalar_select %p272, %s23, 0
        %s274 = smul.addr %s273, 8
        %s275 = scalar_lea.vmem %s2, %s274
        %p276 = scmp.lt.s32.totalorder %s23, 0
        %s277 = scalar_select %p276, %s23, 0
        %s278 = smul.addr %s277, 8
        %s279 = scalar_lea.vmem %s3, %s278
        %v280 = vld [vmem:[%s275] sm:$0xff]
        %v281 = vld [vmem:[%s279] sm:$0xff]
        %v282 = vlaneseq
        %v283 = vand.u32 %v282, 127
        %vm284 = vcmp.lt.s32.totalorder %v283, 16
        %v285 = vld [vmem:[%s264] sm:$0xff]
        %v286 = vsel %vm284, 1, 0
        %vm287 = vcmp.eq.s32.totalorder %v286, 1
        %289 = vset.pattern.permute.xlu0 0
        %290 = vperm.xlu0 %289, %v285
        %v291 = vpop.permute.xlu0 %290
        %v293 = vsel %vm287, %v291, 1.0
        %v294 = vld [vmem:[%s271] sm:$0xff]
        %296 = vset.pattern.permute.xlu0 0
        %297 = vperm.xlu0 %296, %v294
        %v298 = vpop.permute.xlu0 %297
        %v300 = vsel %vm287, %v298, 1.0
        %v301 = vmul.f32 %v280, %v300
        %302 = vst [vmem:[%s257] sm:$0xff] %v301
        %v303 = vmul.f32 %v281, %v293
        %s304 = scalar_lea.vmem %s257, 8 [#allocation2]
        %305 = vst [vmem:[%s304] sm:$0xff] %v303
        %v306 = vmul.f32 %v280, %v293
        %s307 = scalar_lea.vmem %s257, 16 [#allocation2]
        %308 = vst [vmem:[%s307] sm:$0xff] %v306
        %v309 = vmul.f32 %v281, %v300
        %s310 = scalar_lea.vmem %s257, 24 [#allocation2]
        %311 = vst [vmem:[%s310] sm:$0xff] %v309
        %s312 = sand.u32 %s148, 1
        %s313 = scalar_lea.sflag [#allocation3], %s312
        %s314 = sand.u32 %s148, 1
        %s315 = smul.addr %s314, 32
        %s316 = scalar_lea.vmem [#allocation2], %s315
        // Predicated region
        $region37: #{tpu_custom_call.1} parent=35 // pred_check
          %p317 = pneg %p158
        $region38: #{tpu_custom_call.1} parent=35 // pred_check_branch
          %319 = sbr.rel (%p317) target = $region40
        $region39: #{tpu_custom_call.1} parent=35 // pred_region
          %s321 = ssub.s32 512, 512
          %322 = vsyncadd %s313, %s321
          %s323 = smul.addr %s22, 4
          %s324 = sadd.s32 %s23, %s323
          %s325 = smul.addr %s324, 128
          %s326 = scalar_lea.hbm %s4, %s325
          %s327 = sshll.u32 %s316, 4
          %s328 = int_to_ptr.vmem [resolvable:$true] %s327
          %333 = dma.vmem_to_hbm [thread:$0]  %s328, 512, %s326, %s313, 128, 128, 8
        $region40: #{tpu_custom_call.1} parent=35 // pred_fallthru
          _
      $region36: #{tpu_custom_call.1} parent=5 // pred_fallthru
        _
      %p334 = scmp.le.s32.totalorder 2, %s13
      // Predicated region
      $region41: #{tpu_custom_call.1} parent=5 // pred_check
        %p335 = pneg %p334
      $region42: #{tpu_custom_call.1} parent=5 // pred_check_branch
        %337 = sbr.rel (%p335) target = $region44
      $region43: #{tpu_custom_call.1} parent=5 // pred_region
        %s338 = ssub.s32 %s13, 2
        // Predicated region
        $region45: #{tpu_custom_call.1} parent=43 // pred_check
          %p339 = pneg %p164
        $region46: #{tpu_custom_call.1} parent=43 // pred_check_branch
          %341 = sbr.rel (%p339) target = $region48
        $region47: #{tpu_custom_call.1} parent=43 // pred_region
          %s342 = sand.u32 %s149, 1
          %s343 = scalar_lea.sflag [#allocation3], %s342
          %s344 = sand.u32 %s149, 1
          %s345 = smul.addr %s344, 32
          %s346 = scalar_lea.vmem [#allocation2], %s345
          %347 = dma.done %s343, 512
        $region48: #{tpu_custom_call.1} parent=43 // pred_fallthru
          _
      $region44: #{tpu_custom_call.1} parent=5 // pred_fallthru
        _
    $region6: #{tpu_custom_call.1} parent=1 // loop_footer
      %s17 = sadd.s32 1, %s13
    $region7: #{tpu_custom_call.1} parent=1 // loop_footer_branch
      %12 = sbr.rel target = $region3
    $region8: #{tpu_custom_call.1} parent=1 // loop_exit
      _
    %348 = vsyncpa [#allocation3], 1
    %s349 = scalar_lea.sflag [#allocation3], 1
    %350 = vsyncpa %s349, 1

</llo_original>
